<compile_context>
chip_gen: v7x
topology: tpu7x:2x2x1
jax: 0.10.0
libtpu: 0.0.40
codegen_flags: <defaults>
</compile_context>

<pallas_src>
import jax
import jax.numpy as jnp
from jax.experimental import pallas as pl
from jax.experimental.pallas import tpu as pltpu


def _round_up(x, m):
    return ((x + m - 1) // m) * m


def robmodel_kernel(x_ref, w_ref, b_ref, o_ref):
    """Computes one (tm, tn) logits tile; grid axis 2 is the D (=K) reduction.

    The output tile doubles as the f32 accumulator: its BlockSpec maps every k
    to the same (i, j) block, so it stays resident in VMEM for the whole K loop
    and is written back to HBM exactly once.
    """
    k = pl.program_id(2)

    @pl.when(k == 0)
    def _init():
        # Bias written exactly once per output tile (broadcast (1, tn) -> (tm, tn)).
        o_ref[...] = jnp.broadcast_to(b_ref[...], o_ref.shape)

    # bf16 x bf16 -> f32 accumulate on the MXU.  x arrives as f32 and is cast on
    # the VPU (free slot); the weight tile is already bf16 in HBM.
    o_ref[...] += jnp.dot(
        x_ref[...].astype(jnp.bfloat16),
        w_ref[...],
        preferred_element_type=jnp.float32,
    )


def prepare_robmodel_params(w, b, mean_c, std_c, hw):
    """Fold Normalize into the classifier and pad/cast for TPU.

    ((x - mean)/std) @ w + b == x @ (w * inv_std[:, None]) + (b - (mean*inv_std) @ w)
    Done once (like model construction), not per forward call.
    """
    D, N = w.shape
    inv_std_d = jnp.repeat(1.0 / std_c, hw)            # [D], channel-major (.view(B,-1))
    mean_d = jnp.repeat(mean_c, hw)                    # [D]
    w_folded = w * inv_std_d[:, None]                  # [D, N]  f32
    b_folded = b - (mean_d * inv_std_d) @ w            # [N]     f32

    # Tile sizes derived from padded dims (all (8, 128)-aligned).
    n_pad = _round_up(N, 128)
    tn = 256 if n_pad % 256 == 0 else 128
    d_pad = _round_up(D, 128)
    tk = 512 if d_pad % 512 == 0 else (256 if d_pad % 256 == 0 else 128)

    # Zero-pad: padded rows/cols of W and padded bias lanes contribute nothing.
    w_p = jnp.zeros((d_pad, n_pad), jnp.float32).at[:D, :N].set(w_folded)
    b_p = jnp.zeros((1, n_pad), jnp.float32).at[0, :N].set(b_folded)
    w_bf16 = w_p.astype(jnp.bfloat16)                  # weights cast once, offline

    return dict(w=w_bf16, b=b_p, D=D, N=N, d_pad=d_pad, n_pad=n_pad, tk=tk, tn=tn)


def rob_model_forward(x_nchw, params):
    """RobModel.forward: normalize (folded into params) + linear classifier."""
    B, C, H, W = x_nchw.shape
    D, N = params["D"], params["N"]
    d_pad, n_pad = params["d_pad"], params["n_pad"]
    tk, tn = params["tk"], params["tn"]
    assert C * H * W == D

    # Flatten channel-major (torch .view(B, -1)) and pad batch / feature dims.
    m8 = _round_up(B, 8)
    tm = 128 if m8 >= 128 else m8
    m_pad = _round_up(B, tm)
    x2d = x_nchw.reshape(B, D)
    x_p = jnp.zeros((m_pad, d_pad), jnp.float32).at[:B, :D].set(x2d)

    grid = (m_pad // tm, n_pad // tn, d_pad // tk)

    out = pl.pallas_call(
        robmodel_kernel,
        out_shape=jax.ShapeDtypeStruct((m_pad, n_pad), jnp.float32),
        grid_spec=pltpu.PrefetchScalarGridSpec(
            num_scalar_prefetch=0,
            grid=grid,
            in_specs=[
                pl.BlockSpec((tm, tk), lambda i, j, k: (i, k)),   # x tile (f32)
                pl.BlockSpec((tk, tn), lambda i, j, k: (k, j)),   # W tile (bf16)
                pl.BlockSpec((1, tn), lambda i, j, k: (0, j)),    # bias tile (f32)
            ],
            out_specs=pl.BlockSpec((tm, tn), lambda i, j, k: (i, j)),
        ),
        compiler_params=pltpu.CompilerParams(
            dimension_semantics=("parallel", "parallel", "arbitrary"),
            vmem_limit_bytes=32 * 1024 * 1024,
        ),
    )(x_p, params["w"], params["b"])

    return out[:B, :N]


if __name__ == "__main__":
    # Small shapes consistent with the module (3-channel Normalize default).
    B, C, H, W = 2, 3, 16, 16
    n_classes = 10
    D = C * H * W

    key = jax.random.PRNGKey(0)
    kx, kw, kb = jax.random.split(key, 3)

    x = jax.random.normal(kx, (B, C, H, W), dtype=jnp.float32)

    # Normalize buffers (deterministic, ImageNet-style instead of the trivial 0/1 default).
    mean_c = jnp.array([0.485, 0.456, 0.406], dtype=jnp.float32)
    std_c = jnp.array([0.229, 0.224, 0.225], dtype=jnp.float32)

    # Synthetic inner-model params (deterministic init).
    w = jax.random.normal(kw, (D, n_classes), dtype=jnp.float32) / jnp.sqrt(D)
    b = jax.random.normal(kb, (n_classes,), dtype=jnp.float32) * 0.01

    params = prepare_robmodel_params(w, b, mean_c, std_c, H * W)
    out = jax.block_until_ready(rob_model_forward(x, params))
    assert out.shape == (B, n_classes)

    # (1) Tight check vs. a same-precision reference (bf16 operands, f32 accum):
    #     validates the tiled kernel plumbing exactly.
    xq = x.reshape(B, D).astype(jnp.bfloat16)
    wq = params["w"][:D, :n_classes]
    bq = params["b"][0, :n_classes]
    ref_q = jnp.dot(xq, wq, preferred_element_type=jnp.float32) + bq
    assert jnp.allclose(out, ref_q, atol=1e-3, rtol=1e-3), "mismatch vs bf16 reference"

    # (2) Semantic check vs. the full-precision RobModel forward
    #     ((x - mean)/std @ W + b); tolerance loosened only for the bf16 operands.
    mean_d = jnp.repeat(mean_c, H * W)[None, :]
    std_d = jnp.repeat(std_c, H * W)[None, :]
    ref = (x.reshape(B, D) - mean_d) / std_d @ w + b[None, :]
    assert jnp.allclose(out, ref, atol=1e-1, rtol=5e-2), "mismatch vs f32 reference"

    print("KERNEL_OK")
</pallas_src>

<mosaic_0001>
module attributes {stable_mosaic.version = 11 : i64} {
  func.func @robmodel_kernel(%arg0: i32, %arg1: i32, %arg2: i32, %arg3: memref<8x256xf32, #tpu.memory_space<vmem>>, %arg4: memref<256x128xbf16, #tpu.memory_space<vmem>>, %arg5: memref<1x128xf32, #tpu.memory_space<vmem>>, %arg6: memref<8x128xf32, #tpu.memory_space<vmem>>) attributes {dimension_semantics = [#tpu.dimension_semantics<parallel>, #tpu.dimension_semantics<parallel>, #tpu.dimension_semantics<arbitrary>], iteration_bounds = array<i64: 1, 1, 3>, scalar_prefetch = 0 : i64, scratch_operands = 0 : i64, tpu.core_type = #tpu.core_type<tc>, window_params = [{transform_indices = @transform_0, window_bounds = array<i64: 8, 256>}, {transform_indices = @transform_1, window_bounds = array<i64: 256, 128>}, {transform_indices = @transform_2, window_bounds = array<i64: 1, 128>}, {transform_indices = @transform_3, window_bounds = array<i64: 8, 128>}]} {
    %c0_i32 = arith.constant 0 : i32
    %0 = arith.cmpi eq, %arg2, %c0_i32 : i32
    %1 = arith.extui %0 : i1 to i32
    %c0_i32_0 = arith.constant 0 : i32
    %2 = arith.cmpi ne, %1, %c0_i32_0 : i32
    scf.if %2 {
      %c0_8 = arith.constant 0 : index
      %c0_9 = arith.constant 0 : index
      %10 = vector.load %arg5[%c0_8, %c0_9] : memref<1x128xf32, #tpu.memory_space<vmem>>, vector<1x128xf32>
      %11 = vector.shape_cast %10 : vector<1x128xf32> to vector<1x128xf32>
      %12 = vector.broadcast %11 : vector<1x128xf32> to vector<8x128xf32>
      %c0_10 = arith.constant 0 : index
      %c0_11 = arith.constant 0 : index
      %13 = vector.load %arg6[%c0_10, %c0_11] : memref<8x128xf32, #tpu.memory_space<vmem>>, vector<8x128xf32>
      tpu.vector_store %arg6[%c0_10, %c0_11], %12 {strides = array<i32>} : memref<8x128xf32, #tpu.memory_space<vmem>>, vector<8x128xf32>,
    } else {
    }
    %c0 = arith.constant 0 : index
    %c0_1 = arith.constant 0 : index
    %3 = vector.load %arg6[%c0, %c0_1] : memref<8x128xf32, #tpu.memory_space<vmem>>, vector<8x128xf32>
    %c0_2 = arith.constant 0 : index
    %c0_3 = arith.constant 0 : index
    %4 = vector.load %arg3[%c0_2, %c0_3] : memref<8x256xf32, #tpu.memory_space<vmem>>, vector<8x256xf32>
    %5 = arith.truncf %4 : vector<8x256xf32> to vector<8x256xbf16>
    %c0_4 = arith.constant 0 : index
    %c0_5 = arith.constant 0 : index
    %6 = vector.load %arg4[%c0_4, %c0_5] : memref<256x128xbf16, #tpu.memory_space<vmem>>, vector<256x128xbf16>
    %cst = arith.constant dense<0.000000e+00> : vector<8x128xf32>
    %7 = tpu.matmul %5, %6, %cst {dimension_numbers = #tpu.dot_dimension_numbers<[1], [0], [0], [1], [0, 0, 1, 1], [], []>} : vector<8x256xbf16>, vector<256x128xbf16>, vector<8x128xf32> -> vector<8x128xf32>
    %8 = arith.addf %3, %7 : vector<8x128xf32>
    %c0_6 = arith.constant 0 : index
    %c0_7 = arith.constant 0 : index
    %9 = vector.load %arg6[%c0_6, %c0_7] : memref<8x128xf32, #tpu.memory_space<vmem>>, vector<8x128xf32>
    tpu.vector_store %arg6[%c0_6, %c0_7], %8 {strides = array<i32>} : memref<8x128xf32, #tpu.memory_space<vmem>>, vector<8x128xf32>,
    return
  }
  func.func @transform_0(%arg0: i32, %arg1: i32, %arg2: i32) -> (i32, i32) {
    %c0_i32 = arith.constant 0 : i32
    return %arg0, %arg2 : i32, i32
  }
  func.func @transform_1(%arg0: i32, %arg1: i32, %arg2: i32) -> (i32, i32) {
    %c0_i32 = arith.constant 0 : i32
    return %arg2, %arg1 : i32, i32
  }
  func.func @transform_2(%arg0: i32, %arg1: i32, %arg2: i32) -> (i32, i32) {
    %c0_i32 = arith.constant 0 : i32
    %c0_i32_0 = arith.constant 0 : i32
    return %c0_i32, %arg1 : i32, i32
  }
  func.func @transform_3(%arg0: i32, %arg1: i32, %arg2: i32) -> (i32, i32) {
    %c0_i32 = arith.constant 0 : i32
    return %arg0, %arg1 : i32, i32
  }
}

</mosaic_0001>

<llo_original>
// kernel: tpu_custom_call.1
$region0: #{tpu_custom_call.1}
  #allocation0 [shape = 'u32[]', space=smem, size = 0x4, offset = 0x4, fixed_abs, tag = 'smem constant byte address 0x4 - core index']
  #allocation1 [shape = 'u32[144,128]{1,0:T(1,128)}', space=vmem, size = 0x12000, scoped, tag = 'internal scratch']
  %s0 = inlined_call_operand.hbm [shape: f32[8,768], index: 0, kind: input, shape index: {}]
  %s1 = inlined_call_operand.hbm [shape: bf16[768,128], index: 1, kind: input, shape index: {}]
  %s2 = inlined_call_operand.vmem [shape: f32[1,128], index: 2, kind: input, shape index: {}]
  %s3 = inlined_call_operand.hbm [shape: f32[8,128], index: 3, kind: output, shape index: {}]
  %s4 = sld [smem:[#allocation0]]
  $region57: #{tpu_custom_call.1} parent=0
    _
  %s6 = ssub.s32 1, %s4
  %s7 = scalar_select 0, %s6, %s4
  $region1: #{tpu_custom_call.1} parent=0
    #allocation2 [shape = 'u8[16384]{0}', space=vmem, size = 0x4000, scoped, tag = 'input window, operand 0']
    #allocation3 [shape = 's32[2]{0}', space=sflag, size = 0x8, scoped, tag = 'scoped memory for tpu_custom_call.1']
    #allocation4 [shape = 's32[2]{0}', space=sflag, size = 0x8, scoped, tag = 'scoped memory for tpu_custom_call.1']
    #allocation5 [shape = 'u8[131072]{0}', space=vmem, size = 0x20000, scoped, tag = 'input window, operand 1']
    #allocation6 [shape = 's32[2]{0}', space=sflag, size = 0x8, scoped, tag = 'scoped memory for tpu_custom_call.1']
    #allocation7 [shape = 'u8[4096]{0}', space=vmem, size = 0x1000, scoped, tag = 'output window, operand 0, single buffered']
    %8 = vsyncpa [#allocation3], 0
    %s9 = scalar_lea.sflag [#allocation3], 1
    %10 = vsyncpa %s9, 0
    %11 = vsyncpa [#allocation6], 0
    %s12 = scalar_lea.sflag [#allocation6], 1
    %13 = vsyncpa %s12, 0
    %14 = vsyncpa [#allocation4], 0
    loop: start=0, step=1, limit=5
    $region2: #{tpu_custom_call.1} parent=1 // loop_pre_header
      _
    $region3: #{tpu_custom_call.1} parent=1 // loop_header
      %s16 = sphi 0, %s20
      %p17 = scmp.ge.s32.totalorder %s16, 5
      %s23 = sphi 0, %s42
      %s24 = sphi 0, %s38
      %s25 = sphi 0, %s34
      %s26 = sphi 0, %s23
      %s27 = sphi 0, %s24
      %s28 = sphi 0, %s25
      %s29 = sphi 0, %s26
      %s30 = sphi 0, %s27
      %s31 = sphi 0, %s28
      %s47 = sphi 0, %s49
      %s50 = sphi 0, %s47
      %s51 = sphi 0, %s50
      %s67 = sphi 0, %s51
      %s75 = sphi 0, %s77
      %s78 = sphi 0, %s75
      %s79 = sphi 0, %s78
      %s95 = sphi 0, %s79
      %s101 = sphi 0, %s103
      %s104 = sphi 0, %s101
      %s105 = sphi 0, %s104
      %s121 = sphi 0, %s105
      %s129 = sphi 0, %s131
      %s132 = sphi 0, %s129
      %s133 = sphi 0, %s132
      %s149 = sphi 0, %s133
    $region4: #{tpu_custom_call.1} parent=1 // loop_header_branch
      %19 = sbr.rel (%p17) target = $region8
    $region5: #{tpu_custom_call.1} parent=1 // loop_body
      %s21 = ssub.s32 %s16, 1
      %s22 = ssub.s32 %s16, 2
      %s32 = sadd.s32 1, %s25
      %p33 = scmp.ge.s32.totalorder %s32, 3
      %s34 = scalar_select %p33, 0, %s32
      %s35 = sadd.s32 1, %s24
      %s36 = scalar_select %p33, %s35, %s24
      %p37 = scmp.ge.s32.totalorder %s36, 1
      %s38 = scalar_select %p37, 0, %s36
      %s39 = sadd.s32 1, %s23
      %s40 = scalar_select %p37, %s39, %s23
      %p41 = scmp.ge.s32.totalorder %s40, 1
      %s42 = scalar_select %p41, 0, %s40
      %s43 = ssub.s32 %s23, %s42
      %s44 = ssub.s32 %s25, %s34
      %s45 = sor.u32 %s43, %s44
      %p46 = scmp.eq.s32.totalorder %s45, 0
      %s48 = sadd.s32 %s47, 1
      %s49 = scalar_select %p46, %s47, %s48
      %p52 = pneg %p46
      %p53 = scmp.eq.s32.totalorder %s16, 2
      %p54 = por %p52, %p53
      %p55 = scmp.ne.s32.totalorder %s47, %s50
      %p56 = scmp.eq.s32.totalorder %s16, 0
      %p57 = por %p55, %p56
      %p58 = scmp.ne.s32.totalorder %s47, %s50
      %p59 = scmp.eq.s32.totalorder %s21, 2
      %p60 = por %p58, %p59
      %p61 = scmp.ne.s32.totalorder %s50, %s51
      %p62 = scmp.eq.s32.totalorder %s21, 0
      %p63 = por %p61, %p62
      %p64 = scmp.ne.s32.totalorder %s50, %s51
      %p65 = scmp.eq.s32.totalorder %s22, 2
      %p66 = por %p64, %p65
      %p68 = scmp.ne.s32.totalorder %s51, %s67
      %p69 = scmp.eq.s32.totalorder %s22, 0
      %p70 = por %p68, %p69
      %s71 = ssub.s32 %s25, %s34
      %s72 = ssub.s32 %s24, %s38
      %s73 = sor.u32 %s71, %s72
      %p74 = scmp.eq.s32.totalorder %s73, 0
      %s76 = sadd.s32 %s75, 1
      %s77 = scalar_select %p74, %s75, %s76
      %p80 = pneg %p74
      %p81 = scmp.eq.s32.totalorder %s16, 2
      %p82 = por %p80, %p81
      %p83 = scmp.ne.s32.totalorder %s75, %s78
      %p84 = scmp.eq.s32.totalorder %s16, 0
      %p85 = por %p83, %p84
      %p86 = scmp.ne.s32.totalorder %s75, %s78
      %p87 = scmp.eq.s32.totalorder %s21, 2
      %p88 = por %p86, %p87
      %p89 = scmp.ne.s32.totalorder %s78, %s79
      %p90 = scmp.eq.s32.totalorder %s21, 0
      %p91 = por %p89, %p90
      %p92 = scmp.ne.s32.totalorder %s78, %s79
      %p93 = scmp.eq.s32.totalorder %s22, 2
      %p94 = por %p92, %p93
      %p96 = scmp.ne.s32.totalorder %s79, %s95
      %p97 = scmp.eq.s32.totalorder %s22, 0
      %p98 = por %p96, %p97
      %s99 = ssub.s32 %s24, %s38
      %p100 = scmp.eq.s32.totalorder %s99, 0
      %s102 = sadd.s32 %s101, 1
      %s103 = scalar_select %p100, %s101, %s102
      %p106 = pneg %p100
      %p107 = scmp.eq.s32.totalorder %s16, 2
      %p108 = por %p106, %p107
      %p109 = scmp.ne.s32.totalorder %s101, %s104
      %p110 = scmp.eq.s32.totalorder %s16, 0
      %p111 = por %p109, %p110
      %p112 = scmp.ne.s32.totalorder %s101, %s104
      %p113 = scmp.eq.s32.totalorder %s21, 2
      %p114 = por %p112, %p113
      %p115 = scmp.ne.s32.totalorder %s104, %s105
      %p116 = scmp.eq.s32.totalorder %s21, 0
      %p117 = por %p115, %p116
      %p118 = scmp.ne.s32.totalorder %s104, %s105
      %p119 = scmp.eq.s32.totalorder %s22, 2
      %p120 = por %p118, %p119
      %p122 = scmp.ne.s32.totalorder %s105, %s121
      %p123 = scmp.eq.s32.totalorder %s22, 0
      %p124 = por %p122, %p123
      %s125 = ssub.s32 %s23, %s42
      %s126 = ssub.s32 %s24, %s38
      %s127 = sor.u32 %s125, %s126
      %p128 = scmp.eq.s32.totalorder %s127, 0
      %s130 = sadd.s32 %s129, 1
      %s131 = scalar_select %p128, %s129, %s130
      %p134 = pneg %p128
      %p135 = scmp.eq.s32.totalorder %s16, 2
      %p136 = por %p134, %p135
      %p137 = scmp.ne.s32.totalorder %s129, %s132
      %p138 = scmp.eq.s32.totalorder %s16, 0
      %p139 = por %p137, %p138
      %p140 = scmp.ne.s32.totalorder %s129, %s132
      %p141 = scmp.eq.s32.totalorder %s21, 2
      %p142 = por %p140, %p141
      %p143 = scmp.ne.s32.totalorder %s132, %s133
      %p144 = scmp.eq.s32.totalorder %s21, 0
      %p145 = por %p143, %p144
      %p146 = scmp.ne.s32.totalorder %s132, %s133
      %p147 = scmp.eq.s32.totalorder %s22, 2
      %p148 = por %p146, %p147
      %p150 = scmp.ne.s32.totalorder %s133, %s149
      %p151 = scmp.eq.s32.totalorder %s22, 0
      %p152 = por %p150, %p151
      %p153 = scmp.le.s32.totalorder 1, %s16
      %p154 = scmp.lt.s32.totalorder %s16, 4
      %p155 = pnand %p153, %p154
      %p156 = pneg %p155
      // Predicated region
      $region9: #{tpu_custom_call.1} parent=5 // pred_check
        _
      $region10: #{tpu_custom_call.1} parent=5 // pred_check_branch
        %158 = sbr.rel (%p155) target = $region12
      $region11: #{tpu_custom_call.1} parent=5 // pred_region
        %s159 = ssub.s32 %s16, 1
        // Predicated region
        $region13: #{tpu_custom_call.1} parent=11 // pred_check
          %p160 = pneg %p117
        $region14: #{tpu_custom_call.1} parent=11 // pred_check_branch
          %162 = sbr.rel (%p160) target = $region16
        $region15: #{tpu_custom_call.1} parent=11 // pred_region
          %p163 = scmp.lt.s32.totalorder %s27, 0
          %s164 = scalar_select %p163, %s27, 0
          %s165 = scalar_lea.vmem %s2, %s164
        $region16: #{tpu_custom_call.1} parent=11 // pred_fallthru
          _
      $region12: #{tpu_custom_call.1} parent=5 // pred_fallthru
        _
      %p166 = scmp.lt.s32.totalorder %s16, 3
      // Predicated region
      $region17: #{tpu_custom_call.1} parent=5 // pred_check
        %p167 = pneg %p166
      $region18: #{tpu_custom_call.1} parent=5 // pred_check_branch
        %169 = sbr.rel (%p167) target = $region20
      $region19: #{tpu_custom_call.1} parent=5 // pred_region
        // Predicated region
        $region21: #{tpu_custom_call.1} parent=19 // pred_check
          %p170 = pneg %p57
        $region22: #{tpu_custom_call.1} parent=19 // pred_check_branch
          %172 = sbr.rel (%p170) target = $region24
        $region23: #{tpu_custom_call.1} parent=19 // pred_region
          %s173 = sand.u32 %s47, 1
          %s174 = scalar_lea.sflag [#allocation3], %s173
          %s175 = sand.u32 %s47, 1
          %s176 = smul.addr %s175, 16
          %s177 = scalar_lea.vmem [#allocation2], %s176
          %s178 = smul.u32 2, %s25
          %s180 = ssub.s32 256, 256
          %181 = vsyncadd %s174, %s180
          %s182 = smul.addr %s23, 6
          %s183 = sadd.s32 %s178, %s182
          %s184 = smul.addr %s183, 128
          %s185 = scalar_lea.hbm %s0, %s184
          %s187 = sshll.u32 %s177, 4
          %s188 = int_to_ptr.vmem [resolvable:$true] %s187
          %190 = dma.hbm_to_vmem [thread:$0]  %s185, 256, %s188, %s174
        $region24: #{tpu_custom_call.1} parent=19 // pred_fallthru
          _
        // Predicated region
        $region25: #{tpu_custom_call.1} parent=19 // pred_check
          %p191 = pneg %p85
        $region26: #{tpu_custom_call.1} parent=19 // pred_check_branch
          %193 = sbr.rel (%p191) target = $region28
        $region27: #{tpu_custom_call.1} parent=19 // pred_region
          %s194 = sand.u32 %s75, 1
          %s195 = scalar_lea.sflag [#allocation6], %s194
          %s196 = sand.u32 %s75, 1
          %s197 = smul.addr %s196, 128
          %s198 = scalar_lea.vmem [#allocation5], %s197
          %s199 = smul.u32 32, %s25
          %s201 = ssub.s32 2048, 2048
          %202 = vsyncadd %s195, %s201
          %s203 = sadd.s32 %s24, %s199
          %s204 = smul.addr %s203, 64
          %s205 = scalar_lea.hbm %s1, %s204
          %s206 = sshll.u32 %s198, 4
          %s207 = int_to_ptr.vmem [resolvable:$true] %s206
          %212 = dma.hbm_to_vmem [thread:$0]  %s205, 2048, %s207, %s195, 64, 64, 4
        $region28: #{tpu_custom_call.1} parent=19 // pred_fallthru
          _
      $region20: #{tpu_custom_call.1} parent=5 // pred_fallthru
        _
      %p213 = scmp.le.s32.totalorder 1, %s16
      %p214 = scmp.lt.s32.totalorder %s16, 4
      %p215 = pnand %p213, %p214
      %p216 = pneg %p215
      // Predicated region
      $region29: #{tpu_custom_call.1} parent=5 // pred_check
        _
      $region30: #{tpu_custom_call.1} parent=5 // pred_check_branch
        %218 = sbr.rel (%p215) target = $region32
      $region31: #{tpu_custom_call.1} parent=5 // pred_region
        %s219 = ssub.s32 %s16, 1
        %s220 = sand.u32 %s50, 1
        %s221 = scalar_lea.sflag [#allocation3], %s220
        %s222 = sand.u32 %s50, 1
        %s223 = smul.addr %s222, 16
        %s224 = scalar_lea.vmem [#allocation2], %s223
        // Predicated region
        $region33: #{tpu_custom_call.1} parent=31 // pred_check
          %p225 = pneg %p63
        $region34: #{tpu_custom_call.1} parent=31 // pred_check_branch
          %227 = sbr.rel (%p225) target = $region36
        $region35: #{tpu_custom_call.1} parent=31 // pred_region
          %228 = dma.done %s221, 256
        $region36: #{tpu_custom_call.1} parent=31 // pred_fallthru
          _
        %s229 = sand.u32 %s78, 1
        %s230 = scalar_lea.sflag [#allocation6], %s229
        %s231 = sand.u32 %s78, 1
        %s232 = smul.addr %s231, 128
        %s233 = scalar_lea.vmem [#allocation5], %s232
        // Predicated region
        $region37: #{tpu_custom_call.1} parent=31 // pred_check
          %p234 = pneg %p91
        $region38: #{tpu_custom_call.1} parent=31 // pred_check_branch
          %236 = sbr.rel (%p234) target = $region40
        $region39: #{tpu_custom_call.1} parent=31 // pred_region
          %237 = dma.done %s230, 2048
        $region40: #{tpu_custom_call.1} parent=31 // pred_fallthru
          _
        %s238 = sand.u32 %s50, 1
        %s239 = scalar_lea.sflag [#allocation3], %s238
        %s240 = sand.u32 %s50, 1
        %s241 = smul.addr %s240, 16
        %s242 = scalar_lea.vmem [#allocation2], %s241
        %p243 = pneg %p63
        %p244 = pneg %p60
        %s245 = sand.u32 %s78, 1
        %s246 = scalar_lea.sflag [#allocation6], %s245
        %s247 = sand.u32 %s78, 1
        %s248 = smul.addr %s247, 128
        %s249 = scalar_lea.vmem [#allocation5], %s248
        %p250 = pneg %p91
        %p251 = pneg %p88
        %p252 = scmp.lt.s32.totalorder %s27, 0
        %s253 = scalar_select %p252, %s27, 0
        %s254 = scalar_lea.vmem %s2, %s253
        %p255 = pneg %p117
        %p256 = pneg %p114
        %p257 = pneg %p145
        %p258 = pneg %p142
        %s259 = smul.u32 2, %s28
        %s260 = smul.u32 32, %s28
        %p261 = scmp.lt.s32.totalorder %s27, 0
        %s262 = scalar_select %p261, %s27, 0
        %s263 = scalar_lea.vmem %s2, %s262
        %p265 = scmp.eq.s32.totalorder %s28, 0
        // Predicated region
        $region41: #{tpu_custom_call.1} parent=31 // pred_check
          %p266 = pneg %p265
        $region42: #{tpu_custom_call.1} parent=31 // pred_check_branch
          %268 = sbr.rel (%p266) target = $region44
        $region43: #{tpu_custom_call.1} parent=31 // pred_region
          %v269 = vld [vmem:[%s263] sm:$0x1]
          %v271 = vlaneseq
          %v272 = vshrl.u32 %v271, 7
          %v273 = vsub.s32 0, %v272
          %v274 = vrot.slane %v269, %v273
          %276 = vst [vmem:[#allocation7] sm:$0xff] %v274
        $region44: #{tpu_custom_call.1} parent=31 // pred_fallthru
          _
        %v277 = vld [vmem:[#allocation7] sm:$0xff]
        %v278 = vld [vmem:[%s224] sm:$0xff]
        %v279 = vld [vmem:[%s224 + $0x8] sm:$0xff]
        %v280 = vpack.c.bf16 %v278, %v278
        %v281 = vpack.c.bf16 %v279, %v279
        %v282 = vld [vmem:[%s233] sm:$0xf]
        %v283 = vld [vmem:[%s233 + $0x4] sm:$0xf]
        %v284 = vld [vmem:[%s233 + $0x8] sm:$0xf]
        %v285 = vld [vmem:[%s233 + $0xc] sm:$0xf]
        %v286 = vld [vmem:[%s233 + $0x10] sm:$0xf]
        %v287 = vld [vmem:[%s233 + $0x14] sm:$0xf]
        %v288 = vld [vmem:[%s233 + $0x18] sm:$0xf]
        %v289 = vld [vmem:[%s233 + $0x1c] sm:$0xf]
        %v290 = vld [vmem:[%s233 + $0x20] sm:$0xf]
        %v291 = vld [vmem:[%s233 + $0x24] sm:$0xf]
        %v292 = vld [vmem:[%s233 + $0x28] sm:$0xf]
        %v293 = vld [vmem:[%s233 + $0x2c] sm:$0xf]
        %v294 = vld [vmem:[%s233 + $0x30] sm:$0xf]
        %v295 = vld [vmem:[%s233 + $0x34] sm:$0xf]
        %v296 = vld [vmem:[%s233 + $0x38] sm:$0xf]
        %v297 = vld [vmem:[%s233 + $0x3c] sm:$0xf]
        %v298 = vld [vmem:[%s233 + $0x40] sm:$0xf]
        %v299 = vld [vmem:[%s233 + $0x44] sm:$0xf]
        %v300 = vld [vmem:[%s233 + $0x48] sm:$0xf]
        %v301 = vld [vmem:[%s233 + $0x4c] sm:$0xf]
        %v302 = vld [vmem:[%s233 + $0x50] sm:$0xf]
        %v303 = vld [vmem:[%s233 + $0x54] sm:$0xf]
        %v304 = vld [vmem:[%s233 + $0x58] sm:$0xf]
        %v305 = vld [vmem:[%s233 + $0x5c] sm:$0xf]
        %v306 = vld [vmem:[%s233 + $0x60] sm:$0xf]
        %v307 = vld [vmem:[%s233 + $0x64] sm:$0xf]
        %v308 = vld [vmem:[%s233 + $0x68] sm:$0xf]
        %v309 = vld [vmem:[%s233 + $0x6c] sm:$0xf]
        %v310 = vld [vmem:[%s233 + $0x70] sm:$0xf]
        %v311 = vld [vmem:[%s233 + $0x74] sm:$0xf]
        %v312 = vld [vmem:[%s233 + $0x78] sm:$0xf]
        %v313 = vld [vmem:[%s233 + $0x7c] sm:$0xf]
        %v346 = vunpack.c.l.b16 %v282
        %v347 = vunpack.c.l.b16 %v283
        %v348 = vunpack.c.l.b16 %v284
        %v349 = vunpack.c.l.b16 %v285
        %v350 = vunpack.c.l.b16 %v286
        %v351 = vunpack.c.l.b16 %v287
        %v352 = vunpack.c.l.b16 %v288
        %v353 = vunpack.c.l.b16 %v289
        %v354 = vunpack.c.l.b16 %v290
        %v355 = vunpack.c.l.b16 %v291
        %v356 = vunpack.c.l.b16 %v292
        %v357 = vunpack.c.l.b16 %v293
        %v358 = vunpack.c.l.b16 %v294
        %v359 = vunpack.c.l.b16 %v295
        %v360 = vunpack.c.l.b16 %v296
        %v361 = vunpack.c.l.b16 %v297
        %v362 = vunpack.c.l.b16 %v298
        %v363 = vunpack.c.l.b16 %v299
        %v364 = vunpack.c.l.b16 %v300
        %v365 = vunpack.c.l.b16 %v301
        %v366 = vunpack.c.l.b16 %v302
        %v367 = vunpack.c.l.b16 %v303
        %v368 = vunpack.c.l.b16 %v304
        %v369 = vunpack.c.l.b16 %v305
        %v370 = vunpack.c.l.b16 %v306
        %v371 = vunpack.c.l.b16 %v307
        %v372 = vunpack.c.l.b16 %v308
        %v373 = vunpack.c.l.b16 %v309
        %v374 = vunpack.c.l.b16 %v310
        %v375 = vunpack.c.l.b16 %v311
        %v376 = vunpack.c.l.b16 %v312
        %v377 = vunpack.c.l.b16 %v313
        %v378 = vpack.c.b16 %v347, %v346
        %v379 = vpack.c.b16 %v349, %v348
        %v380 = vpack.c.b16 %v351, %v350
        %v381 = vpack.c.b16 %v353, %v352
        %v382 = vpack.c.b16 %v355, %v354
        %v383 = vpack.c.b16 %v357, %v356
        %v384 = vpack.c.b16 %v359, %v358
        %v385 = vpack.c.b16 %v361, %v360
        %v386 = vpack.c.b16 %v363, %v362
        %v387 = vpack.c.b16 %v365, %v364
        %v388 = vpack.c.b16 %v367, %v366
        %v389 = vpack.c.b16 %v369, %v368
        %v390 = vpack.c.b16 %v371, %v370
        %v391 = vpack.c.b16 %v373, %v372
        %v392 = vpack.c.b16 %v375, %v374
        %v393 = vpack.c.b16 %v377, %v376
        %410 = vmatprep.subr.bf16.mxu0 0
        %411 = vmatpush1.bf16.msra.mxu0 %v378
        %412 = vmatprep.subr.bf16.mxu0 0
        %413 = vmatpush1.bf16.msra.mxu0 %v379
        %414 = vmatprep.subr.bf16.mxu0 0
        %415 = vmatpush1.bf16.msra.mxu0 %v380
        %416 = vmatprep.subr.bf16.mxu0 0
        %417 = vmatpush1.bf16.msra.mxu0 %v381
        %418 = vmatprep.subr.bf16.mxu0 0
        %419 = vmatpush1.bf16.msra.mxu0 %v382
        %420 = vmatprep.subr.bf16.mxu0 0
        %421 = vmatpush1.bf16.msra.mxu0 %v383
        %422 = vmatprep.subr.bf16.mxu0 0
        %423 = vmatpush1.bf16.msra.mxu0 %v384
        %424 = vmatprep.subr.bf16.mxu0 0
        %425 = vmatpush1.bf16.msra.mxu0 %v385
        %426 = vmatprep.subr.bf16.mxu0 0
        %427 = vmatpush1.bf16.msra.mxu0 %v386
        %428 = vmatprep.subr.bf16.mxu0 0
        %429 = vmatpush1.bf16.msra.mxu0 %v387
        %430 = vmatprep.subr.bf16.mxu0 0
        %431 = vmatpush1.bf16.msra.mxu0 %v388
        %432 = vmatprep.subr.bf16.mxu0 0
        %433 = vmatpush1.bf16.msra.mxu0 %v389
        %434 = vmatprep.subr.bf16.mxu0 0
        %435 = vmatpush1.bf16.msra.mxu0 %v390
        %436 = vmatprep.subr.bf16.mxu0 0
        %437 = vmatpush1.bf16.msra.mxu0 %v391
        %438 = vmatprep.subr.bf16.mxu0 0
        %439 = vmatpush1.bf16.msra.mxu0 %v392
        %440 = vmatprep.subr.bf16.mxu0 0
        %441 = vmatpush1.bf16.msra.mxu0 %v393
        %442 = vmatprep.mubr.bf16.mxu0 %v281
        %443 = vmatmul.mubr.bf16.gmra.mrb[0].mxu0 %v280
        %v444 = vpop.f32.mrb[0].mxu0
        %v445 = vadd.f32 0.0, %v444
        %v446 = vpop.f32.mrb[0].mxu0
        %v447 = vpop.f32.mrb[0].mxu0
        %v448 = vpop.f32.mrb[0].mxu0
        %449 = vdwg.mxu0
        %v450 = vadd.f32 %v277, %v445
        %451 = vst [vmem:[#allocation7] sm:$0xff] %v450
        // Predicated region
        $region45: #{tpu_custom_call.1} parent=31 // pred_check
          %p452 = pneg %p142
        $region46: #{tpu_custom_call.1} parent=31 // pred_check_branch
          %454 = sbr.rel (%p452) target = $region48
        $region47: #{tpu_custom_call.1} parent=31 // pred_region
          %s456 = ssub.s32 128, 128
          %457 = vsyncadd [#allocation4], %s456
          %s458 = sadd.s32 %s27, %s26
          %s459 = smul.addr %s458, 128
          %s460 = scalar_lea.hbm %s3, %s459
          %s462 = sshll.u32 [#allocation7], 4
          %s463 = int_to_ptr.vmem [resolvable:$true] %s462
          %465 = dma.vmem_to_hbm [thread:$0]  %s463, 128, %s460, [#allocation4]
        $region48: #{tpu_custom_call.1} parent=31 // pred_fallthru
          _
        // Predicated region
        $region49: #{tpu_custom_call.1} parent=31 // pred_check
          %p466 = pneg %p142
        $region50: #{tpu_custom_call.1} parent=31 // pred_check_branch
          %468 = sbr.rel (%p466) target = $region52
        $region51: #{tpu_custom_call.1} parent=31 // pred_region
          %469 = dma.done [#allocation4], 128
        $region52: #{tpu_custom_call.1} parent=31 // pred_fallthru
          _
      $region32: #{tpu_custom_call.1} parent=5 // pred_fallthru
        _
      %p470 = scmp.le.s32.totalorder 2, %s16
      // Predicated region
      $region53: #{tpu_custom_call.1} parent=5 // pred_check
        %p471 = pneg %p470
      $region54: #{tpu_custom_call.1} parent=5 // pred_check_branch
        %473 = sbr.rel (%p471) target = $region56
      $region55: #{tpu_custom_call.1} parent=5 // pred_region
        %s474 = ssub.s32 %s16, 2
      $region56: #{tpu_custom_call.1} parent=5 // pred_fallthru
        _
    $region6: #{tpu_custom_call.1} parent=1 // loop_footer
      %s20 = sadd.s32 1, %s16
    $region7: #{tpu_custom_call.1} parent=1 // loop_footer_branch
      %15 = sbr.rel target = $region3
    $region8: #{tpu_custom_call.1} parent=1 // loop_exit
      _
    %475 = vsyncpa [#allocation3], 1
    %s476 = scalar_lea.sflag [#allocation3], 1
    %477 = vsyncpa %s476, 1
    %478 = vsyncpa [#allocation6], 1
    %s479 = scalar_lea.sflag [#allocation6], 1
    %480 = vsyncpa %s479, 1
    %481 = vsyncpa [#allocation4], 1
    %s482 = scalar_lea.sflag [#allocation4], 1
    %483 = vsyncpa %s482, 1

</llo_original>
